<compile_context>
chip_gen: v7x
topology: tpu7x:2x2x1
jax: 0.10.0
libtpu: 0.0.40
codegen_flags: <defaults>
</compile_context>

<pallas_src>
import functools

import jax
import jax.numpy as jnp
from jax.experimental import pallas as pl
from jax.experimental.pallas import tpu as pltpu


_WCR = 128     # output columns per selector matmul (review: 256 -> 128)
_M_CAP = 256   # max rows of one matmul M tile (channels folded into M)


def _pixel_unshuffle_kernel(x_ref, s_ref, o_ref, *, r, wp, wcr, chunk_starts,
                            m_t, n_sub, acc_dtype):
    # x_ref: (cblk, hout_t, r*Wp)  row h holds the r input rows {h*r+i} back to back
    # s_ref: (r*wcr, r*wcr)        0/1 selector: S[w*r + j, j*wcr + w] = 1
    # o_ref: (cblk, r*r, hout_t, Wout)
    cblk = x_ref.shape[0]
    sel = s_ref[...]
    for s in range(n_sub):              # M sub-tiles of the H block (static)
        m0 = s * m_t
        for i in range(r):              # row phase (de-interleaved by the reshape)
            for w0 in chunk_starts:     # static output-column chunk start
                lo = i * wp + w0 * r
                seg = x_ref[:, m0:m0 + m_t, lo:lo + r * wcr]   # (cblk, m_t, r*wcr)
                # Fold channels into the matmul M dim (free merge: m_t % 8/16 == 0).
                seg = seg.reshape(cblk * m_t, r * wcr)
                # One matmul de-interleaves all r column phases of this chunk.
                z = jnp.dot(seg, sel, preferred_element_type=acc_dtype)
                for j in range(r):
                    zj = z[:, j * wcr:(j + 1) * wcr].reshape(cblk, m_t, wcr)
                    o_ref[:, i * r + j, m0:m0 + m_t, w0:w0 + wcr] = (
                        zj.astype(o_ref.dtype))


def _largest_divisor_leq(n, cap):
    best = 1
    for d in range(1, min(n, cap) + 1):
        if n % d == 0:
            best = d
    return best


def _pixel_unshuffle_xla(x, r):
    """Plain reshape/transpose path (tiny W, ints): XLA beats the kernel here."""
    B, C, Hp, Wp = x.shape
    y = x.reshape(B, C, Hp // r, r, Wp // r, r).transpose(0, 1, 3, 5, 2, 4)
    return y.reshape(B, C * r * r, Hp // r, Wp // r)


def pixel_unshuffle(x, r):
    """Pallas equivalent of the PyTorch PixelUnshuffle module's forward."""
    B, C, H, W = x.shape
    if r == 1:
        return x, (H, W)

    pad_H = (r - H % r) % r
    pad_W = (r - W % r) % r
    if pad_H > 0 or pad_W > 0:
        # torch F.pad(..., mode='reflect') on the last two dims == jnp reflect pad.
        x = jnp.pad(x, ((0, 0), (0, 0), (0, pad_H), (0, pad_W)), mode="reflect")
    Hp, Wp = x.shape[2], x.shape[3]
    Hout, Wout = Hp // r, Wp // r

    # Dispatch (review item): the selector-matmul kernel only pays off with
    # lane-dense output rows; tiny images and non-f32/bf16 dtypes go to XLA.
    if (x.dtype not in (jnp.float32, jnp.bfloat16)) or Wout < _WCR or Hout < 8:
        return _pixel_unshuffle_xla(x, r), (H, W)

    itemsize = jnp.dtype(x.dtype).itemsize

    # Free row-major reshape: xr[b, c, h, i*Wp + W] == x[b, c, h*r + i, W].
    xr = x.reshape(B, C, Hout, r * Wp)
    lane_bytes = r * Wp * itemsize

    # ---- Per-generation block budget (review: grow blocks on v6e/v7x) -------
    try:
        vmem_cap = int(getattr(pltpu.get_tpu_info(), "vmem_capacity_bytes",
                               64 * 1024 * 1024))
    except Exception:
        vmem_cap = 64 * 1024 * 1024
    block_budget = min(8 * 1024 * 1024, max(2 * 1024 * 1024, vmem_cap // 12))

    # ---- Channel blocking: channels are folded into the matmul M dimension --
    cblk = _largest_divisor_leq(C, max(1, min(32, _M_CAP // 8)))
    while cblk > 1 and cblk * 8 * lane_bytes > block_budget:
        cblk -= 1
        while C % cblk:
            cblk -= 1

    # ---- H tiling: DMA block height (hout_t) decoupled from matmul M (m_t) --
    m_t = max(8, (_M_CAP // cblk) // 8 * 8)
    if Hout <= m_t:
        hout_t = m_t = Hout
        n_sub = 1
    else:
        rows_budget = max(m_t, block_budget // max(1, cblk * lane_bytes))
        n_sub = max(1, min(rows_budget // m_t, 8, pl.cdiv(Hout, m_t)))
        hout_t = m_t * n_sub
    n_h = pl.cdiv(Hout, hout_t)

    # ---- W chunking: wcr = 128 keeps stores lane-dense; K=N=r*128 on the MXU -
    wcr = _WCR
    chunk_starts = [k * wcr for k in range(Wout // wcr)]
    if Wout % wcr:
        # Overlapping equal-width tail chunk (double-writes are benign).
        chunk_starts.append(Wout - wcr)
    chunk_starts = tuple(chunk_starts)

    # ---- 0/1 de-interleave selector (exact; bf16 for bf16 activations) ------
    sel_dtype = jnp.bfloat16 if x.dtype == jnp.bfloat16 else jnp.float32
    acc_dtype = sel_dtype   # single-product outputs: bf16 accumulation is exact
    q = jnp.arange(r * wcr)                                   # source column in chunk
    col_src = (jnp.arange(wcr)[None, :] * r + jnp.arange(r)[:, None]).reshape(-1)
    sel = (q[:, None] == col_src[None, :]).astype(sel_dtype)  # (r*wcr, r*wcr)

    # ---- VMEM limit: double-buffered in/out blocks + resident selector ------
    in_blk = cblk * hout_t * r * Wp * itemsize
    out_blk = cblk * r * r * hout_t * Wout * itemsize
    sel_bytes = (r * wcr) * (r * wcr) * jnp.dtype(sel_dtype).itemsize
    working = 2 * (in_blk + out_blk) + 2 * sel_bytes + 4 * 1024 * 1024
    vmem_limit = int(min(max(32 * 1024 * 1024, working * 5 // 4),
                         max(32 * 1024 * 1024, vmem_cap * 3 // 4)))

    # ---- Cost estimate: this call is memory-bound ----------------------------
    flops = (B * (C // cblk) * n_h) * (n_sub * r * len(chunk_starts)) \
        * 2 * cblk * m_t * (r * wcr) ** 2
    cost = pl.CostEstimate(flops=int(flops), transcendentals=0,
                           bytes_accessed=int(2 * B * C * Hp * Wp * itemsize))

    out_shape = jax.ShapeDtypeStruct((B, C, r * r, Hout, Wout), x.dtype)
    kernel = functools.partial(
        _pixel_unshuffle_kernel, r=r, wp=Wp, wcr=wcr, chunk_starts=chunk_starts,
        m_t=m_t, n_sub=n_sub, acc_dtype=acc_dtype)

    # TODO(synk): mark the resident selector single-buffered
    # (pipeline_mode=pl.Buffered(1)); its second buffer only costs sel_bytes.
    y = pl.pallas_call(
        kernel,
        out_shape=out_shape,
        grid=(B, C // cblk, n_h),
        in_specs=[
            pl.BlockSpec((None, cblk, hout_t, r * Wp),
                         lambda b, cb, ht: (b, cb, ht, 0)),
            pl.BlockSpec((r * wcr, r * wcr),
                         lambda b, cb, ht: (0, 0)),          # resident selector
        ],
        out_specs=pl.BlockSpec((None, cblk, r * r, hout_t, Wout),
                               lambda b, cb, ht: (b, cb, 0, ht, 0)),
        compiler_params=pltpu.CompilerParams(
            dimension_semantics=("parallel", "parallel", "parallel"),
            vmem_limit_bytes=vmem_limit,
        ),
        cost_estimate=cost,
    )(xr, sel)

    # Free reshape: (B, C, r*r, Hout, Wout) -> (B, C*r*r, Hout, Wout).
    return y.reshape(B, C * r * r, Hout, Wout), (H, W)


def pixel_unshuffle_ref(x, r):
    """Pure-JAX reference reproducing torch semantics (for verification)."""
    B, C, H, W = x.shape
    pad_H = (r - H % r) % r
    pad_W = (r - W % r) % r
    if pad_H > 0 or pad_W > 0:
        x = jnp.pad(x, ((0, 0), (0, 0), (0, pad_H), (0, pad_W)), mode="reflect")
    Hp, Wp = x.shape[2], x.shape[3]
    y = x.reshape(B, C, Hp // r, r, Wp // r, r)
    y = y.transpose(0, 1, 3, 5, 2, 4)
    return y.reshape(B, C * r * r, Hp // r, Wp // r), (H, W)


if __name__ == "__main__":
    key = jax.random.PRNGKey(0)
    k1, k2, k3 = jax.random.split(key, 3)

    # Case 1: f32, odd spatial dims -> reflect padding; Wout = 128 (kernel path).
    x1 = jax.random.normal(k1, (2, 4, 31, 255), dtype=jnp.float32)
    # Keep values bf16-representable so the 0/1-selector gather is bit-exact
    # under default MXU operand rounding (see TODO about precision=HIGHEST).
    x1 = x1.astype(jnp.bfloat16).astype(jnp.float32)
    y1, (h1, w1) = pixel_unshuffle(x1, 2)
    y1 = jax.block_until_ready(y1)
    y1_ref, _ = pixel_unshuffle_ref(x1, 2)
    assert y1.shape == (2, 16, 16, 128), y1.shape
    assert (h1, w1) == (31, 255)
    assert jnp.allclose(y1, y1_ref), float(jnp.max(jnp.abs(y1 - y1_ref)))

    # Case 2: bf16, Wout = 130 -> kernel path with an overlapping tail chunk.
    x2 = jax.random.normal(k2, (1, 3, 32, 260), dtype=jnp.bfloat16)
    y2, (h2, w2) = pixel_unshuffle(x2, 2)
    y2 = jax.block_until_ready(y2)
    y2_ref, _ = pixel_unshuffle_ref(x2, 2)
    assert y2.shape == (1, 12, 16, 130), y2.shape
    assert (h2, w2) == (32, 260)
    assert jnp.allclose(y2.astype(jnp.float32), y2_ref.astype(jnp.float32))

    # Case 3: tiny spatial dims (Wout = 4) -> XLA fallback path, r = 4.
    x3 = jax.random.normal(k3, (1, 2, 16, 16), dtype=jnp.bfloat16)
    y3, (h3, w3) = pixel_unshuffle(x3, 4)
    y3 = jax.block_until_ready(y3)
    y3_ref, _ = pixel_unshuffle_ref(x3, 4)
    assert y3.shape == (1, 32, 4, 4), y3.shape
    assert (h3, w3) == (16, 16)
    assert jnp.allclose(y3.astype(jnp.float32), y3_ref.astype(jnp.float32))

    print("KERNEL_OK")
</pallas_src>

<mosaic_0001>
module attributes {stable_mosaic.version = 11 : i64} {
  func.func @_pixel_unshuffle_kernel(%arg0: i32, %arg1: i32, %arg2: i32, %arg3: memref<1x4x16x512xf32, #tpu.memory_space<vmem>>, %arg4: memref<256x256xf32, #tpu.memory_space<vmem>>, %arg5: memref<1x4x4x16x128xf32, #tpu.memory_space<vmem>>) attributes {dimension_semantics = [#tpu.dimension_semantics<parallel>, #tpu.dimension_semantics<parallel>, #tpu.dimension_semantics<parallel>], iteration_bounds = array<i64: 2, 1, 1>, scalar_prefetch = 0 : i64, scratch_operands = 0 : i64, tpu.core_type = #tpu.core_type<tc>, window_params = [{transform_indices = @transform_0, window_bounds = array<i64: 1, 4, 16, 512>}, {pipeline_mode = #tpu.pipeline_mode<synchronous>, transform_indices = @transform_1, window_bounds = array<i64: 256, 256>}, {transform_indices = @transform_2, window_bounds = array<i64: 1, 4, 4, 16, 128>}]} {
    %c0 = arith.constant 0 : index
    %c0_0 = arith.constant 0 : index
    %0 = vector.load %arg4[%c0, %c0_0] : memref<256x256xf32, #tpu.memory_space<vmem>>, vector<256x256xf32>
    %c0_1 = arith.constant 0 : index
    %c0_2 = arith.constant 0 : index
    %c0_3 = arith.constant 0 : index
    %c0_4 = arith.constant 0 : index
    %1 = vector.load %arg3[%c0_1, %c0_2, %c0_3, %c0_4] : memref<1x4x16x512xf32, #tpu.memory_space<vmem>>, vector<1x4x16x256xf32>
    %2 = vector.shape_cast %1 : vector<1x4x16x256xf32> to vector<4x16x256xf32>
    %3 = vector.shape_cast %2 : vector<4x16x256xf32> to vector<64x256xf32>
    %cst = arith.constant dense<0.000000e+00> : vector<64x256xf32>
    %4 = tpu.matmul %3, %0, %cst {dimension_numbers = #tpu.dot_dimension_numbers<[1], [0], [0], [1], [0, 0, 1, 1], [], []>} : vector<64x256xf32>, vector<256x256xf32>, vector<64x256xf32> -> vector<64x256xf32>
    %5 = vector.extract_strided_slice %4 {offsets = [0, 0], sizes = [64, 128], strides = [1, 1]} : vector<64x256xf32> to vector<64x128xf32>
    %6 = vector.shape_cast %5 : vector<64x128xf32> to vector<4x16x128xf32>
    %c0_5 = arith.constant 0 : index
    %c0_6 = arith.constant 0 : index
    %c0_7 = arith.constant 0 : index
    %c0_8 = arith.constant 0 : index
    %c0_9 = arith.constant 0 : index
    %7 = vector.load %arg5[%c0_5, %c0_6, %c0_7, %c0_8, %c0_9] : memref<1x4x4x16x128xf32, #tpu.memory_space<vmem>>, vector<1x4x1x16x128xf32>
    %8 = vector.shape_cast %7 : vector<1x4x1x16x128xf32> to vector<4x16x128xf32>
    %9 = vector.shape_cast %6 : vector<4x16x128xf32> to vector<1x4x1x16x128xf32>
    tpu.vector_store %arg5[%c0_5, %c0_6, %c0_7, %c0_8, %c0_9], %9 {strides = array<i32>} : memref<1x4x4x16x128xf32, #tpu.memory_space<vmem>>, vector<1x4x1x16x128xf32>,
    %10 = vector.extract_strided_slice %4 {offsets = [0, 128], sizes = [64, 128], strides = [1, 1]} : vector<64x256xf32> to vector<64x128xf32>
    %11 = vector.shape_cast %10 : vector<64x128xf32> to vector<4x16x128xf32>
    %c0_10 = arith.constant 0 : index
    %c0_11 = arith.constant 0 : index
    %c1 = arith.constant 1 : index
    %c0_12 = arith.constant 0 : index
    %c0_13 = arith.constant 0 : index
    %12 = vector.load %arg5[%c0_10, %c0_11, %c1, %c0_12, %c0_13] : memref<1x4x4x16x128xf32, #tpu.memory_space<vmem>>, vector<1x4x1x16x128xf32>
    %13 = vector.shape_cast %12 : vector<1x4x1x16x128xf32> to vector<4x16x128xf32>
    %14 = vector.shape_cast %11 : vector<4x16x128xf32> to vector<1x4x1x16x128xf32>
    tpu.vector_store %arg5[%c0_10, %c0_11, %c1, %c0_12, %c0_13], %14 {strides = array<i32>} : memref<1x4x4x16x128xf32, #tpu.memory_space<vmem>>, vector<1x4x1x16x128xf32>,
    %c0_14 = arith.constant 0 : index
    %c0_15 = arith.constant 0 : index
    %c0_16 = arith.constant 0 : index
    %c256 = arith.constant 256 : index
    %15 = vector.load %arg3[%c0_14, %c0_15, %c0_16, %c256] : memref<1x4x16x512xf32, #tpu.memory_space<vmem>>, vector<1x4x16x256xf32>
    %16 = vector.shape_cast %15 : vector<1x4x16x256xf32> to vector<4x16x256xf32>
    %17 = vector.shape_cast %16 : vector<4x16x256xf32> to vector<64x256xf32>
    %cst_17 = arith.constant dense<0.000000e+00> : vector<64x256xf32>
    %18 = tpu.matmul %17, %0, %cst_17 {dimension_numbers = #tpu.dot_dimension_numbers<[1], [0], [0], [1], [0, 0, 1, 1], [], []>} : vector<64x256xf32>, vector<256x256xf32>, vector<64x256xf32> -> vector<64x256xf32>
    %19 = vector.extract_strided_slice %18 {offsets = [0, 0], sizes = [64, 128], strides = [1, 1]} : vector<64x256xf32> to vector<64x128xf32>
    %20 = vector.shape_cast %19 : vector<64x128xf32> to vector<4x16x128xf32>
    %c0_18 = arith.constant 0 : index
    %c0_19 = arith.constant 0 : index
    %c2 = arith.constant 2 : index
    %c0_20 = arith.constant 0 : index
    %c0_21 = arith.constant 0 : index
    %21 = vector.load %arg5[%c0_18, %c0_19, %c2, %c0_20, %c0_21] : memref<1x4x4x16x128xf32, #tpu.memory_space<vmem>>, vector<1x4x1x16x128xf32>
    %22 = vector.shape_cast %21 : vector<1x4x1x16x128xf32> to vector<4x16x128xf32>
    %23 = vector.shape_cast %20 : vector<4x16x128xf32> to vector<1x4x1x16x128xf32>
    tpu.vector_store %arg5[%c0_18, %c0_19, %c2, %c0_20, %c0_21], %23 {strides = array<i32>} : memref<1x4x4x16x128xf32, #tpu.memory_space<vmem>>, vector<1x4x1x16x128xf32>,
    %24 = vector.extract_strided_slice %18 {offsets = [0, 128], sizes = [64, 128], strides = [1, 1]} : vector<64x256xf32> to vector<64x128xf32>
    %25 = vector.shape_cast %24 : vector<64x128xf32> to vector<4x16x128xf32>
    %c0_22 = arith.constant 0 : index
    %c0_23 = arith.constant 0 : index
    %c3 = arith.constant 3 : index
    %c0_24 = arith.constant 0 : index
    %c0_25 = arith.constant 0 : index
    %26 = vector.load %arg5[%c0_22, %c0_23, %c3, %c0_24, %c0_25] : memref<1x4x4x16x128xf32, #tpu.memory_space<vmem>>, vector<1x4x1x16x128xf32>
    %27 = vector.shape_cast %26 : vector<1x4x1x16x128xf32> to vector<4x16x128xf32>
    %28 = vector.shape_cast %25 : vector<4x16x128xf32> to vector<1x4x1x16x128xf32>
    tpu.vector_store %arg5[%c0_22, %c0_23, %c3, %c0_24, %c0_25], %28 {strides = array<i32>} : memref<1x4x4x16x128xf32, #tpu.memory_space<vmem>>, vector<1x4x1x16x128xf32>,
    return
  }
  func.func @transform_0(%arg0: i32, %arg1: i32, %arg2: i32) -> (i32, i32, i32, i32) {
    %c0_i32 = arith.constant 0 : i32
    %c0_i32_0 = arith.constant 0 : i32
    return %arg0, %arg1, %arg2, %c0_i32 : i32, i32, i32, i32
  }
  func.func @transform_1(%arg0: i32, %arg1: i32, %arg2: i32) -> (i32, i32) {
    %c0_i32 = arith.constant 0 : i32
    %c0_i32_0 = arith.constant 0 : i32
    %c0_i32_1 = arith.constant 0 : i32
    return %c0_i32, %c0_i32_0 : i32, i32
  }
  func.func @transform_2(%arg0: i32, %arg1: i32, %arg2: i32) -> (i32, i32, i32, i32, i32) {
    %c0_i32 = arith.constant 0 : i32
    %c0_i32_0 = arith.constant 0 : i32
    %c0_i32_1 = arith.constant 0 : i32
    return %arg0, %arg1, %c0_i32, %arg2, %c0_i32_0 : i32, i32, i32, i32, i32
  }
}

</mosaic_0001>

<llo_original>
// kernel: tpu_custom_call.1
$region0: #{tpu_custom_call.1}
  #allocation0 [shape = 'u32[]', space=smem, size = 0x4, offset = 0x4, fixed_abs, tag = 'smem constant byte address 0x4 - core index']
  #allocation1 [shape = 'u32[144,128]{1,0:T(1,128)}', space=vmem, size = 0x12000, scoped, tag = 'internal scratch']
  %s0 = inlined_call_operand.hbm [shape: f32[2,4,16,512], index: 0, kind: input, shape index: {}]
  %s1 = inlined_call_operand.hbm [shape: f32[256,256], index: 1, kind: input, shape index: {}]
  %s2 = inlined_call_operand.hbm [shape: f32[2,4,4,16,128], index: 2, kind: output, shape index: {}]
  %s3 = sld [smem:[#allocation0]]
  $region49: #{tpu_custom_call.1} parent=0
    _
  %s5 = ssub.s32 1, %s3
  %s6 = scalar_select 0, %s5, %s3
  $region1: #{tpu_custom_call.1} parent=0
    #allocation2 [shape = 'u8[262144]{0}', space=vmem, size = 0x40000, scoped, tag = 'input window, operand 0']
    #allocation3 [shape = 's32[2]{0}', space=sflag, size = 0x8, scoped, tag = 'scoped memory for tpu_custom_call.1']
    #allocation4 [shape = 's32[2]{0}', space=sflag, size = 0x8, scoped, tag = 'scoped memory for tpu_custom_call.1']
    #allocation5 [shape = 'u8[262144]{0}', space=vmem, size = 0x40000, scoped, tag = 'input window, operand 1, single buffered']
    #allocation6 [shape = 's32[1]{0}', space=sflag, size = 0x4, scoped, tag = 'scoped memory for tpu_custom_call.1']
    #allocation7 [shape = 'u8[262144]{0}', space=vmem, size = 0x40000, scoped, tag = 'output window, operand 0']
    %7 = vsyncpa [#allocation3], 0
    %s8 = scalar_lea.sflag [#allocation3], 1
    %9 = vsyncpa %s8, 0
    %10 = vsyncpa [#allocation6], 0
    %11 = vsyncpa [#allocation4], 0
    %s12 = scalar_lea.sflag [#allocation4], 1
    %13 = vsyncpa %s12, 0
    loop: start=0, step=1, limit=4
    $region2: #{tpu_custom_call.1} parent=1 // loop_pre_header
      _
    $region3: #{tpu_custom_call.1} parent=1 // loop_header
      %s15 = sphi 0, %s19
      %p16 = scmp.ge.s32.totalorder %s15, 4
      %s22 = sphi 0, %s41
      %s23 = sphi 0, %s37
      %s24 = sphi 0, %s33
      %s25 = sphi 0, %s22
      %s26 = sphi 0, %s23
      %s27 = sphi 0, %s24
      %s28 = sphi 0, %s25
      %s29 = sphi 0, %s26
      %s30 = sphi 0, %s27
      %s48 = sphi 0, %s50
      %s51 = sphi 0, %s48
      %s52 = sphi 0, %s51
      %s68 = sphi 0, %s52
      %s72 = sphi 0, %s72
      %s74 = sphi 0, %s72
      %s75 = sphi 0, %s74
      %s89 = sphi 0, %s75
      %s99 = sphi 0, %s101
      %s102 = sphi 0, %s99
      %s103 = sphi 0, %s102
      %s119 = sphi 0, %s103
    $region4: #{tpu_custom_call.1} parent=1 // loop_header_branch
      %18 = sbr.rel (%p16) target = $region8
    $region5: #{tpu_custom_call.1} parent=1 // loop_body
      %s20 = ssub.s32 %s15, 1
      %s21 = ssub.s32 %s15, 2
      %s31 = sadd.s32 1, %s24
      %p32 = scmp.ge.s32.totalorder %s31, 1
      %s33 = scalar_select %p32, 0, %s31
      %s34 = sadd.s32 1, %s23
      %s35 = scalar_select %p32, %s34, %s23
      %p36 = scmp.ge.s32.totalorder %s35, 1
      %s37 = scalar_select %p36, 0, %s35
      %s38 = sadd.s32 1, %s22
      %s39 = scalar_select %p36, %s38, %s22
      %p40 = scmp.ge.s32.totalorder %s39, 2
      %s41 = scalar_select %p40, 0, %s39
      %s42 = ssub.s32 %s22, %s41
      %s43 = ssub.s32 %s23, %s37
      %s44 = sor.u32 %s42, %s43
      %s45 = ssub.s32 %s24, %s33
      %s46 = sor.u32 %s44, %s45
      %p47 = scmp.eq.s32.totalorder %s46, 0
      %s49 = sadd.s32 %s48, 1
      %s50 = scalar_select %p47, %s48, %s49
      %p53 = pneg %p47
      %p54 = scmp.eq.s32.totalorder %s15, 1
      %p55 = por %p53, %p54
      %p56 = scmp.ne.s32.totalorder %s48, %s51
      %p57 = scmp.eq.s32.totalorder %s15, 0
      %p58 = por %p56, %p57
      %p59 = scmp.ne.s32.totalorder %s48, %s51
      %p60 = scmp.eq.s32.totalorder %s20, 1
      %p61 = por %p59, %p60
      %p62 = scmp.ne.s32.totalorder %s51, %s52
      %p63 = scmp.eq.s32.totalorder %s20, 0
      %p64 = por %p62, %p63
      %p65 = scmp.ne.s32.totalorder %s51, %s52
      %p66 = scmp.eq.s32.totalorder %s21, 1
      %p67 = por %p65, %p66
      %p69 = scmp.ne.s32.totalorder %s52, %s68
      %p70 = scmp.eq.s32.totalorder %s21, 0
      %p71 = por %p69, %p70
      %s73 = sadd.s32 %s72, 1
      %p76 = scmp.eq.s32.totalorder %s15, 1
      %p77 = scmp.ne.s32.totalorder %s72, %s74
      %p78 = scmp.eq.s32.totalorder %s15, 0
      %p79 = por %p77, %p78
      %p80 = scmp.ne.s32.totalorder %s72, %s74
      %p81 = scmp.eq.s32.totalorder %s20, 1
      %p82 = por %p80, %p81
      %p83 = scmp.ne.s32.totalorder %s74, %s75
      %p84 = scmp.eq.s32.totalorder %s20, 0
      %p85 = por %p83, %p84
      %p86 = scmp.ne.s32.totalorder %s74, %s75
      %p87 = scmp.eq.s32.totalorder %s21, 1
      %p88 = por %p86, %p87
      %p90 = scmp.ne.s32.totalorder %s75, %s89
      %p91 = scmp.eq.s32.totalorder %s21, 0
      %p92 = por %p90, %p91
      %s93 = ssub.s32 %s22, %s41
      %s94 = ssub.s32 %s23, %s37
      %s95 = sor.u32 %s93, %s94
      %s96 = ssub.s32 %s24, %s33
      %s97 = sor.u32 %s95, %s96
      %p98 = scmp.eq.s32.totalorder %s97, 0
      %s100 = sadd.s32 %s99, 1
      %s101 = scalar_select %p98, %s99, %s100
      %p104 = pneg %p98
      %p105 = scmp.eq.s32.totalorder %s15, 1
      %p106 = por %p104, %p105
      %p107 = scmp.ne.s32.totalorder %s99, %s102
      %p108 = scmp.eq.s32.totalorder %s15, 0
      %p109 = por %p107, %p108
      %p110 = scmp.ne.s32.totalorder %s99, %s102
      %p111 = scmp.eq.s32.totalorder %s20, 1
      %p112 = por %p110, %p111
      %p113 = scmp.ne.s32.totalorder %s102, %s103
      %p114 = scmp.eq.s32.totalorder %s20, 0
      %p115 = por %p113, %p114
      %p116 = scmp.ne.s32.totalorder %s102, %s103
      %p117 = scmp.eq.s32.totalorder %s21, 1
      %p118 = por %p116, %p117
      %p120 = scmp.ne.s32.totalorder %s103, %s119
      %p121 = scmp.eq.s32.totalorder %s21, 0
      %p122 = por %p120, %p121
      %p123 = scmp.le.s32.totalorder 1, %s15
      %p124 = scmp.lt.s32.totalorder %s15, 3
      %p125 = pnand %p123, %p124
      %p126 = pneg %p125
      // Predicated region
      $region9: #{tpu_custom_call.1} parent=5 // pred_check
        _
      $region10: #{tpu_custom_call.1} parent=5 // pred_check_branch
        %128 = sbr.rel (%p125) target = $region12
      $region11: #{tpu_custom_call.1} parent=5 // pred_region
        %s129 = ssub.s32 %s15, 1
        // Predicated region
        $region13: #{tpu_custom_call.1} parent=11 // pred_check
          %p130 = pneg %p85
        $region14: #{tpu_custom_call.1} parent=11 // pred_check_branch
          %132 = sbr.rel (%p130) target = $region16
        $region15: #{tpu_custom_call.1} parent=11 // pred_region
          %s134 = ssub.s32 8192, 8192
          %135 = vsyncadd [#allocation6], %s134
          %s136 = sshll.u32 [#allocation5], 4
          %s137 = int_to_ptr.vmem [resolvable:$true] %s136
          %142 = dma.hbm_to_vmem [thread:$0]  %s1, 8192, %s137, [#allocation6], 256, 256, 16
        $region16: #{tpu_custom_call.1} parent=11 // pred_fallthru
          _
      $region12: #{tpu_custom_call.1} parent=5 // pred_fallthru
        _
      %p143 = scmp.lt.s32.totalorder %s15, 2
      // Predicated region
      $region17: #{tpu_custom_call.1} parent=5 // pred_check
        %p144 = pneg %p143
      $region18: #{tpu_custom_call.1} parent=5 // pred_check_branch
        %146 = sbr.rel (%p144) target = $region20
      $region19: #{tpu_custom_call.1} parent=5 // pred_region
        // Predicated region
        $region21: #{tpu_custom_call.1} parent=19 // pred_check
          %p147 = pneg %p58
        $region22: #{tpu_custom_call.1} parent=19 // pred_check_branch
          %149 = sbr.rel (%p147) target = $region24
        $region23: #{tpu_custom_call.1} parent=19 // pred_region
          %s150 = sand.u32 %s48, 1
          %s151 = scalar_lea.sflag [#allocation3], %s150
          %s152 = sand.u32 %s48, 1
          %s153 = smul.addr %s152, 256
          %s154 = scalar_lea.vmem [#allocation2], %s153
          %s155 = smul.u32 4, %s23
          %s156 = smul.u32 2, %s24
          %s158 = ssub.s32 4096, 4096
          %159 = vsyncadd %s151, %s158
          %s160 = smul.addr %s156, 4
          %s161 = smul.addr %s155, 8
          %s162 = sadd.s32 %s160, %s161
          %s163 = smul.addr %s22, 32
          %s164 = sadd.s32 %s162, %s163
          %s165 = smul.addr %s164, 128
          %s166 = scalar_lea.hbm %s0, %s165
          %s167 = sshll.u32 %s154, 4
          %s168 = int_to_ptr.vmem [resolvable:$true] %s167
          %173 = dma.hbm_to_vmem [thread:$0]  %s166, 4096, %s168, %s151, 512, 512, 32
        $region24: #{tpu_custom_call.1} parent=19 // pred_fallthru
          _
      $region20: #{tpu_custom_call.1} parent=5 // pred_fallthru
        _
      %p174 = scmp.le.s32.totalorder 1, %s15
      %p175 = scmp.lt.s32.totalorder %s15, 3
      %p176 = pnand %p174, %p175
      %p177 = pneg %p176
      // Predicated region
      $region25: #{tpu_custom_call.1} parent=5 // pred_check
        _
      $region26: #{tpu_custom_call.1} parent=5 // pred_check_branch
        %179 = sbr.rel (%p176) target = $region28
      $region27: #{tpu_custom_call.1} parent=5 // pred_region
        %s180 = ssub.s32 %s15, 1
        %s181 = sand.u32 %s51, 1
        %s182 = scalar_lea.sflag [#allocation3], %s181
        %s183 = sand.u32 %s51, 1
        %s184 = smul.addr %s183, 256
        %s185 = scalar_lea.vmem [#allocation2], %s184
        // Predicated region
        $region29: #{tpu_custom_call.1} parent=27 // pred_check
          %p186 = pneg %p64
        $region30: #{tpu_custom_call.1} parent=27 // pred_check_branch
          %188 = sbr.rel (%p186) target = $region32
        $region31: #{tpu_custom_call.1} parent=27 // pred_region
          %189 = dma.done %s182, 4096
        $region32: #{tpu_custom_call.1} parent=27 // pred_fallthru
          _
        // Predicated region
        $region33: #{tpu_custom_call.1} parent=27 // pred_check
          %p190 = pneg %p85
        $region34: #{tpu_custom_call.1} parent=27 // pred_check_branch
          %192 = sbr.rel (%p190) target = $region36
        $region35: #{tpu_custom_call.1} parent=27 // pred_region
          %193 = dma.done [#allocation6], 8192
        $region36: #{tpu_custom_call.1} parent=27 // pred_fallthru
          _
        %s194 = sand.u32 %s51, 1
        %s195 = scalar_lea.sflag [#allocation3], %s194
        %s196 = sand.u32 %s51, 1
        %s197 = smul.addr %s196, 256
        %s198 = scalar_lea.vmem [#allocation2], %s197
        %p199 = pneg %p64
        %p200 = pneg %p61
        %p201 = pneg %p85
        %p202 = pneg %p82
        %p203 = pneg %p115
        %p204 = pneg %p112
        %s205 = sand.u32 %s102, 1
        %s206 = scalar_lea.sflag [#allocation4], %s205
        %s207 = sand.u32 %s102, 1
        %s208 = smul.addr %s207, 256
        %s209 = scalar_lea.vmem [#allocation7], %s208
        %s210 = smul.u32 4, %s26
        %s211 = smul.u32 2, %s27
        %s212 = smul.u32 4, %s26
        %s213 = smul.u32 2, %s27
        %v214 = vld [vmem:[#allocation5] sm:$0xff]
        %v215 = vld [vmem:[#allocation5 + $0x8] sm:$0xff]
        %v216 = vld [vmem:[#allocation5 + $0x10] sm:$0xff]
        %v217 = vld [vmem:[#allocation5 + $0x18] sm:$0xff]
        %v218 = vld [vmem:[#allocation5 + $0x20] sm:$0xff]
        %v219 = vld [vmem:[#allocation5 + $0x28] sm:$0xff]
        %v220 = vld [vmem:[#allocation5 + $0x30] sm:$0xff]
        %v221 = vld [vmem:[#allocation5 + $0x38] sm:$0xff]
        %v222 = vld [vmem:[#allocation5 + $0x40] sm:$0xff]
        %v223 = vld [vmem:[#allocation5 + $0x48] sm:$0xff]
        %v224 = vld [vmem:[#allocation5 + $0x50] sm:$0xff]
        %v225 = vld [vmem:[#allocation5 + $0x58] sm:$0xff]
        %v226 = vld [vmem:[#allocation5 + $0x60] sm:$0xff]
        %v227 = vld [vmem:[#allocation5 + $0x68] sm:$0xff]
        %v228 = vld [vmem:[#allocation5 + $0x70] sm:$0xff]
        %v229 = vld [vmem:[#allocation5 + $0x78] sm:$0xff]
        %v230 = vld [vmem:[#allocation5 + $0x80] sm:$0xff]
        %v231 = vld [vmem:[#allocation5 + $0x88] sm:$0xff]
        %v232 = vld [vmem:[#allocation5 + $0x90] sm:$0xff]
        %v233 = vld [vmem:[#allocation5 + $0x98] sm:$0xff]
        %v234 = vld [vmem:[#allocation5 + $0xa0] sm:$0xff]
        %v235 = vld [vmem:[#allocation5 + $0xa8] sm:$0xff]
        %v236 = vld [vmem:[#allocation5 + $0xb0] sm:$0xff]
        %v237 = vld [vmem:[#allocation5 + $0xb8] sm:$0xff]
        %v238 = vld [vmem:[#allocation5 + $0xc0] sm:$0xff]
        %v239 = vld [vmem:[#allocation5 + $0xc8] sm:$0xff]
        %v240 = vld [vmem:[#allocation5 + $0xd0] sm:$0xff]
        %v241 = vld [vmem:[#allocation5 + $0xd8] sm:$0xff]
        %v242 = vld [vmem:[#allocation5 + $0xe0] sm:$0xff]
        %v243 = vld [vmem:[#allocation5 + $0xe8] sm:$0xff]
        %v244 = vld [vmem:[#allocation5 + $0xf0] sm:$0xff]
        %v245 = vld [vmem:[#allocation5 + $0xf8] sm:$0xff]
        %v246 = vld [vmem:[#allocation5 + $0x100] sm:$0xff]
        %v247 = vld [vmem:[#allocation5 + $0x108] sm:$0xff]
        %v248 = vld [vmem:[#allocation5 + $0x110] sm:$0xff]
        %v249 = vld [vmem:[#allocation5 + $0x118] sm:$0xff]
        %v250 = vld [vmem:[#allocation5 + $0x120] sm:$0xff]
        %v251 = vld [vmem:[#allocation5 + $0x128] sm:$0xff]
        %v252 = vld [vmem:[#allocation5 + $0x130] sm:$0xff]
        %v253 = vld [vmem:[#allocation5 + $0x138] sm:$0xff]
        %v254 = vld [vmem:[#allocation5 + $0x140] sm:$0xff]
        %v255 = vld [vmem:[#allocation5 + $0x148] sm:$0xff]
        %v256 = vld [vmem:[#allocation5 + $0x150] sm:$0xff]
        %v257 = vld [vmem:[#allocation5 + $0x158] sm:$0xff]
        %v258 = vld [vmem:[#allocation5 + $0x160] sm:$0xff]
        %v259 = vld [vmem:[#allocation5 + $0x168] sm:$0xff]
        %v260 = vld [vmem:[#allocation5 + $0x170] sm:$0xff]
        %v261 = vld [vmem:[#allocation5 + $0x178] sm:$0xff]
        %v262 = vld [vmem:[#allocation5 + $0x180] sm:$0xff]
        %v263 = vld [vmem:[#allocation5 + $0x188] sm:$0xff]
        %v264 = vld [vmem:[#allocation5 + $0x190] sm:$0xff]
        %v265 = vld [vmem:[#allocation5 + $0x198] sm:$0xff]
        %v266 = vld [vmem:[#allocation5 + $0x1a0] sm:$0xff]
        %v267 = vld [vmem:[#allocation5 + $0x1a8] sm:$0xff]
        %v268 = vld [vmem:[#allocation5 + $0x1b0] sm:$0xff]
        %v269 = vld [vmem:[#allocation5 + $0x1b8] sm:$0xff]
        %v270 = vld [vmem:[#allocation5 + $0x1c0] sm:$0xff]
        %v271 = vld [vmem:[#allocation5 + $0x1c8] sm:$0xff]
        %v272 = vld [vmem:[#allocation5 + $0x1d0] sm:$0xff]
        %v273 = vld [vmem:[#allocation5 + $0x1d8] sm:$0xff]
        %v274 = vld [vmem:[#allocation5 + $0x1e0] sm:$0xff]
        %v275 = vld [vmem:[#allocation5 + $0x1e8] sm:$0xff]
        %v276 = vld [vmem:[#allocation5 + $0x1f0] sm:$0xff]
        %v277 = vld [vmem:[#allocation5 + $0x1f8] sm:$0xff]
        %v278 = vld [vmem:[%s185] sm:$0xff]
        %v279 = vld [vmem:[%s185 + $0x8] sm:$0xff]
        %v280 = vld [vmem:[%s185 + $0x20] sm:$0xff]
        %v281 = vld [vmem:[%s185 + $0x28] sm:$0xff]
        %v282 = vld [vmem:[%s185 + $0x40] sm:$0xff]
        %v283 = vld [vmem:[%s185 + $0x48] sm:$0xff]
        %v284 = vld [vmem:[%s185 + $0x60] sm:$0xff]
        %v285 = vld [vmem:[%s185 + $0x68] sm:$0xff]
        %v286 = vld [vmem:[%s185 + $0x80] sm:$0xff]
        %v287 = vld [vmem:[%s185 + $0x88] sm:$0xff]
        %v288 = vld [vmem:[%s185 + $0xa0] sm:$0xff]
        %v289 = vld [vmem:[%s185 + $0xa8] sm:$0xff]
        %v290 = vld [vmem:[%s185 + $0xc0] sm:$0xff]
        %v291 = vld [vmem:[%s185 + $0xc8] sm:$0xff]
        %v292 = vld [vmem:[%s185 + $0xe0] sm:$0xff]
        %v293 = vld [vmem:[%s185 + $0xe8] sm:$0xff]
        %294 = vmatprep.subr.mxu0 %v215
        %295 = vmatpush1.msra.mxu0 %v214
        %296 = vmatprep.subr.mxu0 %v217
        %297 = vmatpush1.msra.mxu0 %v216
        %298 = vmatprep.subr.mxu0 %v219
        %299 = vmatpush1.msra.mxu0 %v218
        %300 = vmatprep.subr.mxu0 %v221
        %301 = vmatpush1.msra.mxu0 %v220
        %302 = vmatprep.subr.mxu0 %v223
        %303 = vmatpush1.msra.mxu0 %v222
        %304 = vmatprep.subr.mxu0 %v225
        %305 = vmatpush1.msra.mxu0 %v224
        %306 = vmatprep.subr.mxu0 %v227
        %307 = vmatpush1.msra.mxu0 %v226
        %308 = vmatprep.subr.mxu0 %v229
        %309 = vmatpush1.msra.mxu0 %v228
        %310 = vmatprep.subr.mxu0 %v231
        %311 = vmatpush1.msra.mxu0 %v230
        %312 = vmatprep.subr.mxu0 %v233
        %313 = vmatpush1.msra.mxu0 %v232
        %314 = vmatprep.subr.mxu0 %v235
        %315 = vmatpush1.msra.mxu0 %v234
        %316 = vmatprep.subr.mxu0 %v237
        %317 = vmatpush1.msra.mxu0 %v236
        %318 = vmatprep.subr.mxu0 %v239
        %319 = vmatpush1.msra.mxu0 %v238
        %320 = vmatprep.subr.mxu0 %v241
        %321 = vmatpush1.msra.mxu0 %v240
        %322 = vmatprep.subr.mxu0 %v243
        %323 = vmatpush1.msra.mxu0 %v242
        %324 = vmatprep.subr.mxu0 %v245
        %325 = vmatpush1.msra.mxu0 %v244
        %326 = vmatprep.subr.mxu0 %v247
        %327 = vmatpush1.msra.mxu0 %v246
        %328 = vmatprep.subr.mxu0 %v249
        %329 = vmatpush1.msra.mxu0 %v248
        %330 = vmatprep.subr.mxu0 %v251
        %331 = vmatpush1.msra.mxu0 %v250
        %332 = vmatprep.subr.mxu0 %v253
        %333 = vmatpush1.msra.mxu0 %v252
        %334 = vmatprep.subr.mxu0 %v255
        %335 = vmatpush1.msra.mxu0 %v254
        %336 = vmatprep.subr.mxu0 %v257
        %337 = vmatpush1.msra.mxu0 %v256
        %338 = vmatprep.subr.mxu0 %v259
        %339 = vmatpush1.msra.mxu0 %v258
        %340 = vmatprep.subr.mxu0 %v261
        %341 = vmatpush1.msra.mxu0 %v260
        %342 = vmatprep.subr.mxu0 %v263
        %343 = vmatpush1.msra.mxu0 %v262
        %344 = vmatprep.subr.mxu0 %v265
        %345 = vmatpush1.msra.mxu0 %v264
        %346 = vmatprep.subr.mxu0 %v267
        %347 = vmatpush1.msra.mxu0 %v266
        %348 = vmatprep.subr.mxu0 %v269
        %349 = vmatpush1.msra.mxu0 %v268
        %350 = vmatprep.subr.mxu0 %v271
        %351 = vmatpush1.msra.mxu0 %v270
        %352 = vmatprep.subr.mxu0 %v273
        %353 = vmatpush1.msra.mxu0 %v272
        %354 = vmatprep.subr.mxu0 %v275
        %355 = vmatpush1.msra.mxu0 %v274
        %356 = vmatprep.subr.mxu0 %v277
        %357 = vmatpush1.msra.mxu0 %v276
        %358 = vmatprep.mubr.f32.mxu0 %v279
        %359 = vmatmul.mubr.f32.gmra.mrb[0].mxu0 %v278
        %v360 = vpop.f32.mrb[0].mxu0
        %v361 = vadd.f32 0.0, %v360
        %v362 = vpop.f32.mrb[0].mxu0
        %v363 = vadd.f32 0.0, %v362
        %364 = vmatprep.mubr.f32.mxu0 %v281
        %365 = vmatmul.mubr.f32.gmra.mrb[0].mxu0 %v280
        %v366 = vpop.f32.mrb[0].mxu0
        %v367 = vadd.f32 0.0, %v366
        %v368 = vpop.f32.mrb[0].mxu0
        %v369 = vadd.f32 0.0, %v368
        %370 = vmatprep.mubr.f32.mxu0 %v283
        %371 = vmatmul.mubr.f32.gmra.mrb[0].mxu0 %v282
        %v372 = vpop.f32.mrb[0].mxu0
        %v373 = vadd.f32 0.0, %v372
        %v374 = vpop.f32.mrb[0].mxu0
        %v375 = vadd.f32 0.0, %v374
        %376 = vmatprep.mubr.f32.mxu0 %v285
        %377 = vmatmul.mubr.f32.gmra.mrb[0].mxu0 %v284
        %v378 = vpop.f32.mrb[0].mxu0
        %v379 = vadd.f32 0.0, %v378
        %v380 = vpop.f32.mrb[0].mxu0
        %v381 = vadd.f32 0.0, %v380
        %382 = vmatprep.mubr.f32.mxu0 %v287
        %383 = vmatmul.mubr.f32.gmra.mrb[0].mxu0 %v286
        %v384 = vpop.f32.mrb[0].mxu0
        %v385 = vadd.f32 0.0, %v384
        %v386 = vpop.f32.mrb[0].mxu0
        %v387 = vadd.f32 0.0, %v386
        %388 = vmatprep.mubr.f32.mxu0 %v289
        %389 = vmatmul.mubr.f32.gmra.mrb[0].mxu0 %v288
        %v390 = vpop.f32.mrb[0].mxu0
        %v391 = vadd.f32 0.0, %v390
        %v392 = vpop.f32.mrb[0].mxu0
        %v393 = vadd.f32 0.0, %v392
        %394 = vmatprep.mubr.f32.mxu0 %v291
        %395 = vmatmul.mubr.f32.gmra.mrb[0].mxu0 %v290
        %v396 = vpop.f32.mrb[0].mxu0
        %v397 = vadd.f32 0.0, %v396
        %v398 = vpop.f32.mrb[0].mxu0
        %v399 = vadd.f32 0.0, %v398
        %400 = vmatprep.mubr.f32.mxu0 %v293
        %401 = vmatmul.mubr.f32.gmra.mrb[0].mxu0 %v292
        %v402 = vpop.f32.mrb[0].mxu0
        %v403 = vadd.f32 0.0, %v402
        %v404 = vpop.f32.mrb[0].mxu0
        %v405 = vadd.f32 0.0, %v404
        %406 = vdwg.mxu0
        %407 = vst [vmem:[%s209] sm:$0xff] %v361
        %408 = vst [vmem:[%s209 + $0x8] sm:$0xff] %v367
        %409 = vst [vmem:[%s209 + $0x40] sm:$0xff] %v373
        %410 = vst [vmem:[%s209 + $0x48] sm:$0xff] %v379
        %411 = vst [vmem:[%s209 + $0x80] sm:$0xff] %v385
        %412 = vst [vmem:[%s209 + $0x88] sm:$0xff] %v391
        %413 = vst [vmem:[%s209 + $0xc0] sm:$0xff] %v397
        %414 = vst [vmem:[%s209 + $0xc8] sm:$0xff] %v403
        %s415 = scalar_lea.vmem %s209, 16 [#allocation7]
        %416 = vst [vmem:[%s415] sm:$0xff] %v363
        %417 = vst [vmem:[%s415 + $0x8] sm:$0xff] %v369
        %418 = vst [vmem:[%s415 + $0x40] sm:$0xff] %v375
        %419 = vst [vmem:[%s415 + $0x48] sm:$0xff] %v381
        %420 = vst [vmem:[%s415 + $0x80] sm:$0xff] %v387
        %421 = vst [vmem:[%s415 + $0x88] sm:$0xff] %v393
        %422 = vst [vmem:[%s415 + $0xc0] sm:$0xff] %v399
        %423 = vst [vmem:[%s415 + $0xc8] sm:$0xff] %v405
        %v424 = vld [vmem:[%s185 + $0x10] sm:$0xff]
        %v425 = vld [vmem:[%s185 + $0x18] sm:$0xff]
        %v426 = vld [vmem:[%s185 + $0x30] sm:$0xff]
        %v427 = vld [vmem:[%s185 + $0x38] sm:$0xff]
        %v428 = vld [vmem:[%s185 + $0x50] sm:$0xff]
        %v429 = vld [vmem:[%s185 + $0x58] sm:$0xff]
        %v430 = vld [vmem:[%s185 + $0x70] sm:$0xff]
        %v431 = vld [vmem:[%s185 + $0x78] sm:$0xff]
        %v432 = vld [vmem:[%s185 + $0x90] sm:$0xff]
        %v433 = vld [vmem:[%s185 + $0x98] sm:$0xff]
        %v434 = vld [vmem:[%s185 + $0xb0] sm:$0xff]
        %v435 = vld [vmem:[%s185 + $0xb8] sm:$0xff]
        %v436 = vld [vmem:[%s185 + $0xd0] sm:$0xff]
        %v437 = vld [vmem:[%s185 + $0xd8] sm:$0xff]
        %v438 = vld [vmem:[%s185 + $0xf0] sm:$0xff]
        %v439 = vld [vmem:[%s185 + $0xf8] sm:$0xff]
        %440 = vmatprep.subr.mxu0 %v215
        %441 = vmatpush1.msra.mxu0 %v214
        %442 = vmatprep.subr.mxu0 %v217
        %443 = vmatpush1.msra.mxu0 %v216
        %444 = vmatprep.subr.mxu0 %v219
        %445 = vmatpush1.msra.mxu0 %v218
        %446 = vmatprep.subr.mxu0 %v221
        %447 = vmatpush1.msra.mxu0 %v220
        %448 = vmatprep.subr.mxu0 %v223
        %449 = vmatpush1.msra.mxu0 %v222
        %450 = vmatprep.subr.mxu0 %v225
        %451 = vmatpush1.msra.mxu0 %v224
        %452 = vmatprep.subr.mxu0 %v227
        %453 = vmatpush1.msra.mxu0 %v226
        %454 = vmatprep.subr.mxu0 %v229
        %455 = vmatpush1.msra.mxu0 %v228
        %456 = vmatprep.subr.mxu0 %v231
        %457 = vmatpush1.msra.mxu0 %v230
        %458 = vmatprep.subr.mxu0 %v233
        %459 = vmatpush1.msra.mxu0 %v232
        %460 = vmatprep.subr.mxu0 %v235
        %461 = vmatpush1.msra.mxu0 %v234
        %462 = vmatprep.subr.mxu0 %v237
        %463 = vmatpush1.msra.mxu0 %v236
        %464 = vmatprep.subr.mxu0 %v239
        %465 = vmatpush1.msra.mxu0 %v238
        %466 = vmatprep.subr.mxu0 %v241
        %467 = vmatpush1.msra.mxu0 %v240
        %468 = vmatprep.subr.mxu0 %v243
        %469 = vmatpush1.msra.mxu0 %v242
        %470 = vmatprep.subr.mxu0 %v245
        %471 = vmatpush1.msra.mxu0 %v244
        %472 = vmatprep.subr.mxu0 %v247
        %473 = vmatpush1.msra.mxu0 %v246
        %474 = vmatprep.subr.mxu0 %v249
        %475 = vmatpush1.msra.mxu0 %v248
        %476 = vmatprep.subr.mxu0 %v251
        %477 = vmatpush1.msra.mxu0 %v250
        %478 = vmatprep.subr.mxu0 %v253
        %479 = vmatpush1.msra.mxu0 %v252
        %480 = vmatprep.subr.mxu0 %v255
        %481 = vmatpush1.msra.mxu0 %v254
        %482 = vmatprep.subr.mxu0 %v257
        %483 = vmatpush1.msra.mxu0 %v256
        %484 = vmatprep.subr.mxu0 %v259
        %485 = vmatpush1.msra.mxu0 %v258
        %486 = vmatprep.subr.mxu0 %v261
        %487 = vmatpush1.msra.mxu0 %v260
        %488 = vmatprep.subr.mxu0 %v263
        %489 = vmatpush1.msra.mxu0 %v262
        %490 = vmatprep.subr.mxu0 %v265
        %491 = vmatpush1.msra.mxu0 %v264
        %492 = vmatprep.subr.mxu0 %v267
        %493 = vmatpush1.msra.mxu0 %v266
        %494 = vmatprep.subr.mxu0 %v269
        %495 = vmatpush1.msra.mxu0 %v268
        %496 = vmatprep.subr.mxu0 %v271
        %497 = vmatpush1.msra.mxu0 %v270
        %498 = vmatprep.subr.mxu0 %v273
        %499 = vmatpush1.msra.mxu0 %v272
        %500 = vmatprep.subr.mxu0 %v275
        %501 = vmatpush1.msra.mxu0 %v274
        %502 = vmatprep.subr.mxu0 %v277
        %503 = vmatpush1.msra.mxu0 %v276
        %504 = vmatprep.mubr.f32.mxu0 %v425
        %505 = vmatmul.mubr.f32.gmra.mrb[0].mxu0 %v424
        %v506 = vpop.f32.mrb[0].mxu0
        %v507 = vadd.f32 0.0, %v506
        %v508 = vpop.f32.mrb[0].mxu0
        %v509 = vadd.f32 0.0, %v508
        %510 = vmatprep.mubr.f32.mxu0 %v427
        %511 = vmatmul.mubr.f32.gmra.mrb[0].mxu0 %v426
        %v512 = vpop.f32.mrb[0].mxu0
        %v513 = vadd.f32 0.0, %v512
        %v514 = vpop.f32.mrb[0].mxu0
        %v515 = vadd.f32 0.0, %v514
        %516 = vmatprep.mubr.f32.mxu0 %v429
        %517 = vmatmul.mubr.f32.gmra.mrb[0].mxu0 %v428
        %v518 = vpop.f32.mrb[0].mxu0
        %v519 = vadd.f32 0.0, %v518
        %v520 = vpop.f32.mrb[0].mxu0
        %v521 = vadd.f32 0.0, %v520
        %522 = vmatprep.mubr.f32.mxu0 %v431
        %523 = vmatmul.mubr.f32.gmra.mrb[0].mxu0 %v430
        %v524 = vpop.f32.mrb[0].mxu0
        %v525 = vadd.f32 0.0, %v524
        %v526 = vpop.f32.mrb[0].mxu0
        %v527 = vadd.f32 0.0, %v526
        %528 = vmatprep.mubr.f32.mxu0 %v433
        %529 = vmatmul.mubr.f32.gmra.mrb[0].mxu0 %v432
        %v530 = vpop.f32.mrb[0].mxu0
        %v531 = vadd.f32 0.0, %v530
        %v532 = vpop.f32.mrb[0].mxu0
        %v533 = vadd.f32 0.0, %v532
        %534 = vmatprep.mubr.f32.mxu0 %v435
        %535 = vmatmul.mubr.f32.gmra.mrb[0].mxu0 %v434
        %v536 = vpop.f32.mrb[0].mxu0
        %v537 = vadd.f32 0.0, %v536
        %v538 = vpop.f32.mrb[0].mxu0
        %v539 = vadd.f32 0.0, %v538
        %540 = vmatprep.mubr.f32.mxu0 %v437
        %541 = vmatmul.mubr.f32.gmra.mrb[0].mxu0 %v436
        %v542 = vpop.f32.mrb[0].mxu0
        %v543 = vadd.f32 0.0, %v542
        %v544 = vpop.f32.mrb[0].mxu0
        %v545 = vadd.f32 0.0, %v544
        %546 = vmatprep.mubr.f32.mxu0 %v439
        %547 = vmatmul.mubr.f32.gmra.mrb[0].mxu0 %v438
        %v548 = vpop.f32.mrb[0].mxu0
        %v549 = vadd.f32 0.0, %v548
        %v550 = vpop.f32.mrb[0].mxu0
        %v551 = vadd.f32 0.0, %v550
        %552 = vdwg.mxu0
        %s553 = scalar_lea.vmem %s209, 32 [#allocation7]
        %554 = vst [vmem:[%s553] sm:$0xff] %v507
        %555 = vst [vmem:[%s553 + $0x8] sm:$0xff] %v513
        %556 = vst [vmem:[%s553 + $0x40] sm:$0xff] %v519
        %557 = vst [vmem:[%s553 + $0x48] sm:$0xff] %v525
        %558 = vst [vmem:[%s553 + $0x80] sm:$0xff] %v531
        %559 = vst [vmem:[%s553 + $0x88] sm:$0xff] %v537
        %560 = vst [vmem:[%s553 + $0xc0] sm:$0xff] %v543
        %561 = vst [vmem:[%s553 + $0xc8] sm:$0xff] %v549
        %s562 = scalar_lea.vmem %s209, 48 [#allocation7]
        %563 = vst [vmem:[%s562] sm:$0xff] %v509
        %564 = vst [vmem:[%s562 + $0x8] sm:$0xff] %v515
        %565 = vst [vmem:[%s562 + $0x40] sm:$0xff] %v521
        %566 = vst [vmem:[%s562 + $0x48] sm:$0xff] %v527
        %567 = vst [vmem:[%s562 + $0x80] sm:$0xff] %v533
        %568 = vst [vmem:[%s562 + $0x88] sm:$0xff] %v539
        %569 = vst [vmem:[%s562 + $0xc0] sm:$0xff] %v545
        %570 = vst [vmem:[%s562 + $0xc8] sm:$0xff] %v551
        %s571 = sand.u32 %s102, 1
        %s572 = scalar_lea.sflag [#allocation4], %s571
        %s573 = sand.u32 %s102, 1
        %s574 = smul.addr %s573, 256
        %s575 = scalar_lea.vmem [#allocation7], %s574
        // Predicated region
        $region37: #{tpu_custom_call.1} parent=27 // pred_check
          %p576 = pneg %p112
        $region38: #{tpu_custom_call.1} parent=27 // pred_check_branch
          %578 = sbr.rel (%p576) target = $region40
        $region39: #{tpu_custom_call.1} parent=27 // pred_region
          %s579 = smul.u32 4, %s26
          %s580 = smul.u32 2, %s27
          %s582 = ssub.s32 4096, 4096
          %583 = vsyncadd %s572, %s582
          %s584 = smul.addr %s579, 8
          %s585 = sadd.s32 %s580, %s584
          %s586 = smul.addr %s25, 32
          %s587 = sadd.s32 %s585, %s586
          %s588 = smul.addr %s587, 128
          %s589 = scalar_lea.hbm %s2, %s588
          %s590 = sshll.u32 %s575, 4
          %s591 = int_to_ptr.vmem [resolvable:$true] %s590
          %596 = dma.vmem_to_hbm [thread:$0]  %s591, 4096, %s589, %s572, 128, 128, 8
        $region40: #{tpu_custom_call.1} parent=27 // pred_fallthru
          _
      $region28: #{tpu_custom_call.1} parent=5 // pred_fallthru
        _
      %p597 = scmp.le.s32.totalorder 2, %s15
      // Predicated region
      $region41: #{tpu_custom_call.1} parent=5 // pred_check
        %p598 = pneg %p597
      $region42: #{tpu_custom_call.1} parent=5 // pred_check_branch
        %600 = sbr.rel (%p598) target = $region44
      $region43: #{tpu_custom_call.1} parent=5 // pred_region
        %s601 = ssub.s32 %s15, 2
        // Predicated region
        $region45: #{tpu_custom_call.1} parent=43 // pred_check
          %p602 = pneg %p118
        $region46: #{tpu_custom_call.1} parent=43 // pred_check_branch
          %604 = sbr.rel (%p602) target = $region48
        $region47: #{tpu_custom_call.1} parent=43 // pred_region
          %s605 = sand.u32 %s103, 1
          %s606 = scalar_lea.sflag [#allocation4], %s605
          %s607 = sand.u32 %s103, 1
          %s608 = smul.addr %s607, 256
          %s609 = scalar_lea.vmem [#allocation7], %s608
          %610 = dma.done %s606, 4096
        $region48: #{tpu_custom_call.1} parent=43 // pred_fallthru
          _
      $region44: #{tpu_custom_call.1} parent=5 // pred_fallthru
        _
    $region6: #{tpu_custom_call.1} parent=1 // loop_footer
      %s19 = sadd.s32 1, %s15
    $region7: #{tpu_custom_call.1} parent=1 // loop_footer_branch
      %14 = sbr.rel target = $region3
    $region8: #{tpu_custom_call.1} parent=1 // loop_exit
      _
    %611 = vsyncpa [#allocation3], 1
    %s612 = scalar_lea.sflag [#allocation3], 1
    %613 = vsyncpa %s612, 1
    %614 = vsyncpa [#allocation6], 1
    %615 = vsyncpa [#allocation4], 1
    %s616 = scalar_lea.sflag [#allocation4], 1
    %617 = vsyncpa %s616, 1

</llo_original>
